<compile_context>
chip_gen: v7x
topology: tpu7x:2x2x1
jax: 0.10.0
libtpu: 0.0.40
codegen_flags: <defaults>
</compile_context>

<pallas_src>
import jax
import jax.numpy as jnp
from jax.experimental import pallas as pl
from jax.experimental.pallas import tpu as pltpu


# Blocks around ~1 MiB already sit near the HBM roofline (per-step overhead
# ~0.35 us is amortized); below that, prefer padding with a bigger tile.
_MIN_BLOCK_BYTES = 1 << 20
_MAX_TILE_ROWS = 2048


def _layer_norm_kernel(eps, d_hid):
    inv_n = 1.0 / d_hid
    # torch.std is unbiased (Bessel, ddof=1); guard d_hid == 1 (torch yields
    # nan there; we keep it finite rather than divide by zero).
    inv_nm1 = 1.0 / max(d_hid - 1, 1)

    def kernel(x_ref, g_ref, b_ref, o_ref):
        x = x_ref[...].astype(jnp.float32)                 # (tile_rows, d_hid)
        mean = jnp.sum(x, axis=-1, keepdims=True) * inv_n
        diff = x - mean
        var = jnp.sum(diff * diff, axis=-1, keepdims=True) * inv_nm1
        denom = jnp.sqrt(var) + eps                        # eps on std, as in torch module
        # Reciprocal on the EUP (separate VLIW slot) instead of a VALU divide;
        # one Newton step on the (tile_rows, 1) column restores f32 accuracy
        # at negligible cost.
        inv = pl.reciprocal(denom, approx=True)
        inv = inv * (2.0 - denom * inv)
        g = g_ref[...].astype(jnp.float32)                 # (1, d_hid), loaded once
        b = b_ref[...].astype(jnp.float32)
        out = diff * (inv * g) + b                         # single mul+mul+add chain
        o_ref[...] = out.astype(o_ref.dtype)

    return kernel


def _choose_tiling(rows, max_tile, row_bytes):
    """Pick (tile_rows, padded_rows): big tiles, no padding when possible,
    and >=2 grid steps when rows are large (so v7x can use both TensorCores)."""
    if rows <= max_tile:
        # Whole row range fits in one block (a full-extent block dim is exempt
        # from the divisible-by-8 rule).  Split in two when big enough so a
        # "parallel" grid can be sharded across v7x's two TensorCores.
        half = (rows // 2) // 8 * 8
        if half >= 8 and rows % half == 0 and half * row_bytes >= _MIN_BLOCK_BYTES:
            return half, rows
        return rows, rows
    if rows % 8 == 0:
        # Largest multiple-of-8 divisor of rows that fits the VMEM budget and
        # still gives reasonably large blocks -> exact tiling, no padding.
        t = max_tile
        while t >= 8 and t * row_bytes >= _MIN_BLOCK_BYTES:
            if rows % t == 0:
                return t, rows
            t -= 8
    # No good exact tiling: pad rows up to a multiple of the largest tile.
    # Padding rows are zeros -> std = 0, ln = 0 / (0 + eps) = 0: finite and
    # independent of the real rows; they are sliced off in the wrapper.
    return max_tile, pl.cdiv(rows, max_tile) * max_tile


def layer_normalization(z, gamma, beta, eps=0.001, tile_rows=None):
    """z: (..., d_hid); gamma, beta: (d_hid,)."""
    orig_shape = z.shape
    d_hid = orig_shape[-1]
    rows = 1
    for s in orig_shape[:-1]:
        rows *= s
    x2d = z.reshape(rows, d_hid)

    itemsize = jnp.dtype(z.dtype).itemsize

    # Generation-aware VMEM budget: half the per-core capacity (=> ~64 MiB of
    # pipeline buffers on v5e/v6e with 128 MiB VMEM, ~32 MiB on v7x's 64 MiB),
    # leaving headroom for compiler temporaries.
    try:
        vmem_cap = int(pltpu.get_tpu_info().vmem_capacity_bytes)
    except Exception:
        vmem_cap = 64 * 1024 * 1024          # conservative fallback (covers v7x)
    budget = vmem_cap // 2

    # Pipeline footprint per tile row: double-buffered input block + output
    # block, plus ~8 B/elem headroom for f32 intermediates.
    per_row = d_hid * (4 * itemsize + 8)
    max_tile = max(8, min(_MAX_TILE_ROWS, (budget // per_row) // 8 * 8))

    if tile_rows is None:
        tile_rows, padded_rows = _choose_tiling(rows, max_tile, d_hid * itemsize)
    else:
        padded_rows = pl.cdiv(rows, tile_rows) * tile_rows

    if padded_rows != rows:
        x2d = jnp.pad(x2d, ((0, padded_rows - rows), (0, 0)))

    # gamma/beta: constant index_map -> DMA'd once, reused across grid steps.
    g2d = gamma.reshape(1, d_hid)
    b2d = beta.reshape(1, d_hid)

    # TODO(synk): for production d_hid < 128 (or non-multiple of 128) pack rows
    # into a lane-dense layout to avoid masked partial stores; typical
    # transformer hidden sizes (multiples of 128) are already lane-dense.
    grid = (padded_rows // tile_rows,)
    out = pl.pallas_call(
        _layer_norm_kernel(eps, d_hid),
        out_shape=jax.ShapeDtypeStruct((padded_rows, d_hid), z.dtype),
        grid_spec=pltpu.PrefetchScalarGridSpec(
            num_scalar_prefetch=0,
            grid=grid,
            in_specs=[
                pl.BlockSpec((tile_rows, d_hid), lambda i: (i, 0)),
                pl.BlockSpec((1, d_hid), lambda i: (0, 0)),
                pl.BlockSpec((1, d_hid), lambda i: (0, 0)),
            ],
            out_specs=pl.BlockSpec((tile_rows, d_hid), lambda i: (i, 0)),
        ),
        compiler_params=pltpu.CompilerParams(
            dimension_semantics=("parallel",),   # rows are independent -> megacore-shardable
            vmem_limit_bytes=int(budget),
        ),
    )(x2d, g2d, b2d)

    if padded_rows != rows:
        out = out[:rows]
    return out.reshape(orig_shape)


def _reference(z, gamma, beta, eps=0.001):
    mean = jnp.mean(z, axis=-1, keepdims=True)
    std = jnp.std(z, axis=-1, keepdims=True, ddof=1)   # unbiased, like torch.std
    ln = (z - mean) / (std + eps)
    return gamma * ln + beta


if __name__ == "__main__":
    key = jax.random.PRNGKey(0)
    batch, seq, d_hid = 2, 8, 32
    z = jax.random.normal(key, (batch, seq, d_hid), dtype=jnp.float32)

    # Parameters exactly as in the module's __init__ (deterministic):
    gamma = jnp.ones((d_hid,), dtype=jnp.float32)
    beta = jnp.zeros((d_hid,), dtype=jnp.float32)

    out = layer_normalization(z, gamma, beta, eps=0.001)
    out = jax.block_until_ready(out)

    ref = _reference(z, gamma, beta, eps=0.001)
    assert out.shape == z.shape
    assert jnp.allclose(out, ref, atol=1e-5, rtol=1e-5)

    print("KERNEL_OK")
</pallas_src>

<mosaic_0001>
module attributes {stable_mosaic.version = 11 : i64} {
  func.func @kernel(%arg0: i32, %arg1: memref<16x32xf32, #tpu.memory_space<vmem>>, %arg2: memref<1x32xf32, #tpu.memory_space<vmem>>, %arg3: memref<1x32xf32, #tpu.memory_space<vmem>>, %arg4: memref<16x32xf32, #tpu.memory_space<vmem>>) attributes {dimension_semantics = [#tpu.dimension_semantics<parallel>], iteration_bounds = array<i64: 1>, scalar_prefetch = 0 : i64, scratch_operands = 0 : i64, tpu.core_type = #tpu.core_type<tc>, window_params = [{transform_indices = @transform_0, window_bounds = array<i64: 16, 32>}, {pipeline_mode = #tpu.pipeline_mode<synchronous>, transform_indices = @transform_1, window_bounds = array<i64: 1, 32>}, {pipeline_mode = #tpu.pipeline_mode<synchronous>, transform_indices = @transform_2, window_bounds = array<i64: 1, 32>}, {transform_indices = @transform_3, window_bounds = array<i64: 16, 32>}]} {
    %c0 = arith.constant 0 : index
    %c0_0 = arith.constant 0 : index
    %0 = vector.load %arg1[%c0, %c0_0] : memref<16x32xf32, #tpu.memory_space<vmem>>, vector<16x32xf32>
    %cst = arith.constant dense<0.000000e+00> : vector<16xf32>
    %1 = vector.multi_reduction <add>, %0, %cst [1] : vector<16x32xf32> to vector<16xf32>
    %2 = vector.shape_cast %1 : vector<16xf32> to vector<16x1xf32>
    %cst_1 = arith.constant 3.125000e-02 : f32
    %3 = vector.broadcast %cst_1 : f32 to vector<16x1xf32>
    %4 = arith.mulf %2, %3 : vector<16x1xf32>
    %5 = vector.broadcast %4 : vector<16x1xf32> to vector<16x32xf32>
    %6 = arith.subf %0, %5 : vector<16x32xf32>
    %7 = arith.mulf %6, %6 : vector<16x32xf32>
    %cst_2 = arith.constant dense<0.000000e+00> : vector<16xf32>
    %8 = vector.multi_reduction <add>, %7, %cst_2 [1] : vector<16x32xf32> to vector<16xf32>
    %9 = vector.shape_cast %8 : vector<16xf32> to vector<16x1xf32>
    %cst_3 = arith.constant 0.0322580636 : f32
    %10 = vector.broadcast %cst_3 : f32 to vector<16x1xf32>
    %11 = arith.mulf %9, %10 : vector<16x1xf32>
    %12 = math.sqrt %11 : vector<16x1xf32>
    %cst_4 = arith.constant 1.000000e-03 : f32
    %13 = vector.broadcast %cst_4 : f32 to vector<16x1xf32>
    %14 = arith.addf %12, %13 : vector<16x1xf32>
    %15 = tpu.reciprocal %14 {approx = true} : vector<16x1xf32> -> vector<16x1xf32>
    %16 = arith.mulf %14, %15 : vector<16x1xf32>
    %cst_5 = arith.constant 2.000000e+00 : f32
    %17 = vector.broadcast %cst_5 : f32 to vector<16x1xf32>
    %18 = arith.subf %17, %16 : vector<16x1xf32>
    %19 = arith.mulf %15, %18 : vector<16x1xf32>
    %c0_6 = arith.constant 0 : index
    %c0_7 = arith.constant 0 : index
    %20 = vector.load %arg2[%c0_6, %c0_7] : memref<1x32xf32, #tpu.memory_space<vmem>>, vector<1x32xf32>
    %c0_8 = arith.constant 0 : index
    %c0_9 = arith.constant 0 : index
    %21 = vector.load %arg3[%c0_8, %c0_9] : memref<1x32xf32, #tpu.memory_space<vmem>>, vector<1x32xf32>
    %22 = vector.broadcast %19 : vector<16x1xf32> to vector<16x32xf32>
    %23 = vector.broadcast %20 : vector<1x32xf32> to vector<16x32xf32>
    %24 = arith.mulf %22, %23 : vector<16x32xf32>
    %25 = arith.mulf %6, %24 : vector<16x32xf32>
    %26 = vector.broadcast %21 : vector<1x32xf32> to vector<16x32xf32>
    %27 = arith.addf %25, %26 : vector<16x32xf32>
    %c0_10 = arith.constant 0 : index
    %c0_11 = arith.constant 0 : index
    %28 = vector.load %arg4[%c0_10, %c0_11] : memref<16x32xf32, #tpu.memory_space<vmem>>, vector<16x32xf32>
    tpu.vector_store %arg4[%c0_10, %c0_11], %27 {strides = array<i32>} : memref<16x32xf32, #tpu.memory_space<vmem>>, vector<16x32xf32>,
    return
  }
  func.func @transform_0(%arg0: i32) -> (i32, i32) {
    %c0_i32 = arith.constant 0 : i32
    %c0_i32_0 = arith.constant 0 : i32
    return %arg0, %c0_i32 : i32, i32
  }
  func.func @transform_1(%arg0: i32) -> (i32, i32) {
    %c0_i32 = arith.constant 0 : i32
    %c0_i32_0 = arith.constant 0 : i32
    %c0_i32_1 = arith.constant 0 : i32
    return %c0_i32, %c0_i32_0 : i32, i32
  }
  func.func @transform_2(%arg0: i32) -> (i32, i32) {
    %c0_i32 = arith.constant 0 : i32
    %c0_i32_0 = arith.constant 0 : i32
    %c0_i32_1 = arith.constant 0 : i32
    return %c0_i32, %c0_i32_0 : i32, i32
  }
  func.func @transform_3(%arg0: i32) -> (i32, i32) {
    %c0_i32 = arith.constant 0 : i32
    %c0_i32_0 = arith.constant 0 : i32
    return %arg0, %c0_i32 : i32, i32
  }
}

</mosaic_0001>

<llo_original>
// kernel: tpu_custom_call.1
$region0: #{tpu_custom_call.1}
  #allocation0 [shape = 'u32[]', space=smem, size = 0x4, offset = 0x4, fixed_abs, tag = 'smem constant byte address 0x4 - core index']
  #allocation1 [shape = 'u32[144,128]{1,0:T(1,128)}', space=vmem, size = 0x12000, scoped, tag = 'internal scratch']
  %s0 = inlined_call_operand.hbm [shape: f32[16,32], index: 0, kind: input, shape index: {}]
  %s1 = inlined_call_operand.vmem [shape: f32[1,32], index: 1, kind: input, shape index: {}]
  %s2 = inlined_call_operand.vmem [shape: f32[1,32], index: 2, kind: input, shape index: {}]
  %s3 = inlined_call_operand.hbm [shape: f32[16,32], index: 3, kind: output, shape index: {}]
  %s4 = sld [smem:[#allocation0]]
  $region26: #{tpu_custom_call.1} parent=0
    _
  %s6 = ssub.s32 1, %s4
  %s7 = scalar_select 0, %s6, %s4
  $region1: #{tpu_custom_call.1} parent=0
    #allocation2 [shape = 'u8[8192]{0}', space=vmem, size = 0x2000, scoped, tag = 'input window, operand 0, single buffered']
    #allocation3 [shape = 's32[1]{0}', space=sflag, size = 0x4, scoped, tag = 'scoped memory for tpu_custom_call.1']
    #allocation4 [shape = 's32[1]{0}', space=sflag, size = 0x4, scoped, tag = 'scoped memory for tpu_custom_call.1']
    #allocation5 [shape = 'u8[8192]{0}', space=vmem, size = 0x2000, scoped, tag = 'output window, operand 0, single buffered']
    %8 = vsyncpa [#allocation3], 0
    %9 = vsyncpa [#allocation4], 0
    // Predicated region
    $region2: #{tpu_custom_call.1} parent=1 // pred_check
      _
    $region3: #{tpu_custom_call.1} parent=1 // pred_check_branch
      %11 = sbr.rel (0) target = $region5
    $region4: #{tpu_custom_call.1} parent=1 // pred_region
      %s13 = ssub.s32 256, 256
      %14 = vsyncadd [#allocation3], %s13
      %s15 = sshll.u32 [#allocation2], 4
      %s16 = int_to_ptr.vmem [resolvable:$true] %s15
      %21 = dma.hbm_to_vmem [thread:$0]  %s0, 256, %s16, [#allocation3], 128, 128, 8
    $region5: #{tpu_custom_call.1} parent=1 // pred_fallthru
      _
    // Predicated region
    $region6: #{tpu_custom_call.1} parent=1 // pred_check
      _
    $region7: #{tpu_custom_call.1} parent=1 // pred_check_branch
      %23 = sbr.rel (0) target = $region9
    $region8: #{tpu_custom_call.1} parent=1 // pred_region
      _
    $region9: #{tpu_custom_call.1} parent=1 // pred_fallthru
      _
    // Predicated region
    $region10: #{tpu_custom_call.1} parent=1 // pred_check
      _
    $region11: #{tpu_custom_call.1} parent=1 // pred_check_branch
      %25 = sbr.rel (0) target = $region13
    $region12: #{tpu_custom_call.1} parent=1 // pred_region
      _
    $region13: #{tpu_custom_call.1} parent=1 // pred_fallthru
      _
    // Predicated region
    $region14: #{tpu_custom_call.1} parent=1 // pred_check
      _
    $region15: #{tpu_custom_call.1} parent=1 // pred_check_branch
      %27 = sbr.rel (0) target = $region17
    $region16: #{tpu_custom_call.1} parent=1 // pred_region
      %28 = dma.done [#allocation3], 256
    $region17: #{tpu_custom_call.1} parent=1 // pred_fallthru
      _
    %v29 = vld [vmem:[#allocation2] sm:$0xff]
    %v30 = vld [vmem:[#allocation2 + $0x8] sm:$0xff]
    %vm31 = vcmask 261120
    %v32 = vsel %vm31, %v29, 0.0
    %33 = vadd.xlane.f32.xlu0 %v32
    %v34 = vpop.xlane.xlu0 %33
    %v35 = vsel %vm31, %v30, 0.0
    %36 = vadd.xlane.f32.xlu0 %v35
    %v37 = vpop.xlane.xlu0 %36
    %v38 = vmul.f32 %v34, 0.03125
    %v39 = vmul.f32 %v37, 0.03125
    %v40 = vsub.f32 %v29, %v38
    %v41 = vsub.f32 %v30, %v39
    %v42 = vmul.f32 %v40, %v40
    %v43 = vmul.f32 %v41, %v41
    %v44 = vsel %vm31, %v42, 0.0
    %45 = vadd.xlane.f32.xlu0 %v44
    %v46 = vpop.xlane.xlu0 %45
    %v47 = vsel %vm31, %v43, 0.0
    %48 = vadd.xlane.f32.xlu0 %v47
    %v49 = vpop.xlane.xlu0 %48
    %v50 = vmul.f32 %v46, 0.032258064
    %v51 = vmul.f32 %v49, 0.032258064
    %v52 = vrsqrt.pop %v50
    %v53 = vmul.f32 %v50, %v52
    %vm54 = vcmp.eq.f32.partialorder %v50, inf
    %v55 = vsel %vm54, %v50, %v53
    %vm56 = vcmp.eq.f32.partialorder %v50, 0.0
    %v57 = vand.u32 %v50, 2147483648
    %v58 = vsel %vm56, %v57, %v55
    %v59 = vrsqrt.pop %v51
    %v60 = vmul.f32 %v51, %v59
    %vm61 = vcmp.eq.f32.partialorder %v51, inf
    %v62 = vsel %vm61, %v51, %v60
    %vm63 = vcmp.eq.f32.partialorder %v51, 0.0
    %v64 = vand.u32 %v51, 2147483648
    %v65 = vsel %vm63, %v64, %v62
    %v66 = vadd.f32 %v58, 0.001
    %v67 = vadd.f32 %v65, 0.001
    %v68 = vrcp.pop %v66
    %v69 = vrcp.pop %v67
    %v70 = vmul.f32 %v66, %v68
    %v71 = vmul.f32 %v67, %v69
    %v72 = vsub.f32 2.0, %v70
    %v73 = vsub.f32 2.0, %v71
    %v74 = vmul.f32 %v68, %v72
    %v75 = vmul.f32 %v69, %v73
    %v76 = vld [vmem:[%s1] sm:$0x1]
    %v77 = vld [vmem:[%s2] sm:$0x1]
    %v79 = vlaneseq
    %v80 = vshrl.u32 %v79, 7
    %v81 = vsub.s32 0, %v80
    %v82 = vrot.slane %v76, %v81
    %v84 = vmul.f32 %v74, %v82
    %v85 = vmul.f32 %v75, %v82
    %v86 = vmul.f32 %v40, %v84
    %v87 = vmul.f32 %v41, %v85
    %v89 = vlaneseq
    %v90 = vshrl.u32 %v89, 7
    %v91 = vsub.s32 0, %v90
    %v92 = vrot.slane %v77, %v91
    %v94 = vadd.f32 %v86, %v92
    %v95 = vadd.f32 %v87, %v92
    %96 = vst.msk [vmem:[#allocation5] sm:$0xff] %vm31, %v94
    %97 = vst.msk [vmem:[#allocation5 + $0x8] sm:$0xff] %vm31, %v95
    // Predicated region
    $region18: #{tpu_custom_call.1} parent=1 // pred_check
      _
    $region19: #{tpu_custom_call.1} parent=1 // pred_check_branch
      %99 = sbr.rel (0) target = $region21
    $region20: #{tpu_custom_call.1} parent=1 // pred_region
      %s101 = ssub.s32 256, 256
      %102 = vsyncadd [#allocation4], %s101
      %s103 = sshll.u32 [#allocation5], 4
      %s104 = int_to_ptr.vmem [resolvable:$true] %s103
      %109 = dma.vmem_to_hbm [thread:$0]  %s104, 256, %s3, [#allocation4], 128, 128, 8
    $region21: #{tpu_custom_call.1} parent=1 // pred_fallthru
      _
    // Predicated region
    $region22: #{tpu_custom_call.1} parent=1 // pred_check
      _
    $region23: #{tpu_custom_call.1} parent=1 // pred_check_branch
      %111 = sbr.rel (0) target = $region25
    $region24: #{tpu_custom_call.1} parent=1 // pred_region
      %112 = dma.done [#allocation4], 256
    $region25: #{tpu_custom_call.1} parent=1 // pred_fallthru
      _
    %113 = vsyncpa [#allocation3], 1
    %114 = vsyncpa [#allocation4], 1

</llo_original>
